<compile_context>
chip_gen: v7x
topology: tpu7x:2x2x1
jax: 0.10.0
libtpu: 0.0.40
codegen_flags: <defaults>
</compile_context>

<pallas_src>
import jax
import jax.numpy as jnp
from jax.experimental import pallas as pl
from jax.experimental.pallas import tpu as pltpu


def _round_up(x, m):
    return ((x + m - 1) // m) * m


def _interagg_kernel(xs_ref, x1_ref, x2_ref, x3_ref,
                     ws_ref, w1_ref, w2_ref, w3_ref, o_ref):
    """o = relu(cat([xs,x1,x2,x3], 1) @ cat([ws;w1;w2;w3], 0)).T for one batch tile.

    xs_ref: [TB, F]  bf16      w*_ref: resident weight slices (bf16)
    x*_ref: [TB, E]  bf16      o_ref : [E, TB] f32 (lane-dense, `.t()` folded in)
    """
    # Four MXU contractions accumulated in f32 == one K = F+3E contraction on
    # the concatenated operand (concat fused away).  MXU has huge slack here
    # (kernel is HBM-BW bound), so the extra pushes are free.
    acc = jnp.dot(xs_ref[...], ws_ref[...], preferred_element_type=jnp.float32)
    acc = acc + jnp.dot(x1_ref[...], w1_ref[...], preferred_element_type=jnp.float32)
    acc = acc + jnp.dot(x2_ref[...], w2_ref[...], preferred_element_type=jnp.float32)
    acc = acc + jnp.dot(x3_ref[...], w3_ref[...], preferred_element_type=jnp.float32)
    # Transpose first (XLU), then ReLU on the lane-dense [E, TB] layout.
    o_ref[...] = jnp.maximum(acc.T, 0.0).astype(o_ref.dtype)


def _pick_batch_tile(B, block_b):
    """Pick a batch tile (multiple of 128) that divides round_up(B,128) exactly.

    When B spans more than one 128-row chunk, force at least two grid steps so
    the 'parallel' batch axis shards across both v7x TensorCores (no-op cost on
    single-TC v5e/v6e).
    """
    b_pad = _round_up(B, 128)
    n128 = b_pad // 128
    max_chunks = max(1, block_b // 128)
    chunks = 1
    for d in range(min(n128, max_chunks), 0, -1):   # largest divisor <= budget
        if n128 % d == 0:
            chunks = d
            break
    if n128 > 1 and chunks == n128:                 # would be a single grid step
        for d in range(n128 // 2, 0, -1):           # largest proper divisor -> >=2 steps
            if n128 % d == 0:
                chunks = d
                break
    return b_pad, chunks * 128


def inter_agg_combine(self_feats, r1_feats, r2_feats, r3_feats, weight,
                      *, block_b=2048, use_bf16=True, out_dtype=jnp.float32):
    """Pallas implementation of: relu(cat(self, r1, r2, r3, dim=1) @ W).T"""
    B, F = self_feats.shape
    E = r1_feats.shape[1]
    K = F + 3 * E
    assert weight.shape == (K, E), weight.shape

    in_dtype = jnp.bfloat16 if use_bf16 else jnp.float32

    b_pad, tb = _pick_batch_tile(B, block_b)
    num_tiles = b_pad // tb

    # Per-stream cast (fuses into the producers) + minimal batch padding
    # (at most 127 rows; no copy at all when B is already a 128-multiple).
    # TODO(synk): for ragged large B, handle the last tile with a masked store
    # instead of the pad copy once that path is needed.
    def prep(x):
        x = x.astype(in_dtype)
        if b_pad != B:
            x = jnp.pad(x, ((0, b_pad - B), (0, 0)))
        return x

    xs, x1, x2, x3 = (prep(t) for t in (self_feats, r1_feats, r2_feats, r3_feats))

    # Split the weight once (tiny) so each stream gets its own resident slice.
    w = weight.astype(in_dtype)
    ws, w1, w2, w3 = w[:F], w[F:F + E], w[F + E:F + 2 * E], w[F + 2 * E:]

    itemsize_in = jnp.dtype(in_dtype).itemsize
    bytes_in = (b_pad * K + K * E) * itemsize_in
    bytes_out = E * b_pad * jnp.dtype(out_dtype).itemsize
    cost = pl.CostEstimate(flops=2 * b_pad * K * E,
                           transcendentals=0,
                           bytes_accessed=bytes_in + bytes_out)

    act_map = lambda i: (i, 0)      # activation tiles march down the batch
    res_map = lambda i: (0, 0)      # weights: same block every step -> VMEM resident

    out = pl.pallas_call(
        _interagg_kernel,
        out_shape=jax.ShapeDtypeStruct((E, b_pad), out_dtype),
        grid=(num_tiles,),
        in_specs=[
            pl.BlockSpec((tb, F), act_map),
            pl.BlockSpec((tb, E), act_map),
            pl.BlockSpec((tb, E), act_map),
            pl.BlockSpec((tb, E), act_map),
            pl.BlockSpec((F, E), res_map),
            pl.BlockSpec((E, E), res_map),
            pl.BlockSpec((E, E), res_map),
            pl.BlockSpec((E, E), res_map),
        ],
        # Transposed, lane-dense output tile.
        out_specs=pl.BlockSpec((E, tb), lambda i: (0, i)),
        compiler_params=pltpu.CompilerParams(
            dimension_semantics=("parallel",),
            # Explicit budget: portable across v5e (16 MiB scoped default),
            # v6e and v7x (32 MiB); actual need at tb=2048 is ~5 MiB.
            vmem_limit_bytes=32 * 1024 * 1024,
        ),
        cost_estimate=cost,
    )(xs, x1, x2, x3, ws, w1, w2, w3)

    # `.t()` already applied in-kernel; drop batch padding only if any.
    if b_pad != B:
        out = out[:, :B]
    return out


def inter_agg_reference(self_feats, r1_feats, r2_feats, r3_feats, weight,
                        use_bf16=True):
    """Pure-JAX reference with the same bf16 rounding / f32 accumulation."""
    if use_bf16:
        cast = lambda x: x.astype(jnp.bfloat16).astype(jnp.float32)
    else:
        cast = lambda x: x
    cat = jnp.concatenate([cast(self_feats), cast(r1_feats),
                           cast(r2_feats), cast(r3_feats)], axis=1)
    return jax.nn.relu(jnp.dot(cat, cast(weight),
                               precision=jax.lax.Precision.HIGHEST)).T


# ----------------------------------------------------------------------------
# Glue: deterministic parameter init + stand-ins for the external sub-modules.
# ----------------------------------------------------------------------------

def xavier_uniform(key, shape):
    fan_in, fan_out = shape
    limit = (6.0 / (fan_in + fan_out)) ** 0.5
    return jax.random.uniform(key, shape, jnp.float32, -limit, limit)


def fetch_feat(features, nodes):
    # self.features(index) -- embedding-table row gather (plain-JAX glue).
    return jnp.take(features, nodes, axis=0)


def simulated_intra_agg(features, neigh_idx, proj_w):
    # TODO(synk): the real intra-relation aggregators (`intraggs`) are external
    # modules passed into InterAgg (and the host-side adjacency-set handling is
    # pure Python); they are simulated here as mean-of-neighbor features plus a
    # linear projection + ReLU.  Fusing these F->E projections into the Pallas
    # kernel (weights are ~4 KiB each, MXU is <15% utilized) is the next
    # structural traffic reduction once the real aggregators are ported.
    neigh_feats = jnp.take(features, neigh_idx, axis=0)   # [B, K, F]
    agg = jnp.mean(neigh_feats, axis=1)                   # [B, F]
    return jax.nn.relu(agg @ proj_w)                      # [B, E]


if __name__ == "__main__":
    num_nodes = 64
    feat_dim = 64
    embed_dim = 32
    n_neigh = 5

    key = jax.random.PRNGKey(0)
    keys = jax.random.split(key, 16)
    k_feat, k_w, k_p1, k_p2, k_p3 = keys[0], keys[1], keys[2], keys[3], keys[4]

    # Node feature / embedding table (self.features).
    features = jax.random.normal(k_feat, (num_nodes, feat_dim), jnp.float32)

    # InterAgg parameter: weight of shape [embed_dim*3 + feat_dim, embed_dim].
    weight = xavier_uniform(k_w, (feat_dim + 3 * embed_dim, embed_dim))

    # Stand-in parameters for the three intra-relation aggregators.
    proj1 = xavier_uniform(k_p1, (feat_dim, embed_dim))
    proj2 = xavier_uniform(k_p2, (feat_dim, embed_dim))
    proj3 = xavier_uniform(k_p3, (feat_dim, embed_dim))

    def run_case(batch, case_keys):
        kn, ka1, ka2, ka3 = case_keys
        nodes = jax.random.randint(kn, (batch,), 0, num_nodes, jnp.int32)
        adj1 = jax.random.randint(ka1, (batch, n_neigh), 0, num_nodes, jnp.int32)
        adj2 = jax.random.randint(ka2, (batch, n_neigh), 0, num_nodes, jnp.int32)
        adj3 = jax.random.randint(ka3, (batch, n_neigh), 0, num_nodes, jnp.int32)

        # Forward pass pieces (glue in plain JAX).
        self_feats = fetch_feat(features, nodes)                  # [B, F]
        r1_feats = simulated_intra_agg(features, adj1, proj1)     # [B, E]
        r2_feats = simulated_intra_agg(features, adj2, proj2)     # [B, E]
        r3_feats = simulated_intra_agg(features, adj3, proj3)     # [B, E]

        # Hot path in Pallas: fused concat + matmul + ReLU + transpose.
        combined = inter_agg_combine(self_feats, r1_feats, r2_feats, r3_feats,
                                     weight)
        combined = jax.block_until_ready(combined)

        ref = inter_agg_reference(self_feats, r1_feats, r2_feats, r3_feats,
                                  weight)
        assert combined.shape == (embed_dim, batch), combined.shape
        assert jnp.allclose(combined, ref, atol=2e-3, rtol=2e-3), \
            f"mismatch vs reference (batch={batch})"

    # Small single-tile case (mirrors the module's tiny batch).
    run_case(8, keys[5:9])
    # Multi-tile ragged case: exercises batch tiling, resident weights and
    # padded-column slicing (grid > 1).
    run_case(300, keys[9:13])

    print("KERNEL_OK")
</pallas_src>

<mosaic_0001>
module attributes {stable_mosaic.version = 11 : i64} {
  func.func @_interagg_kernel(%arg0: i32, %arg1: memref<128x64xbf16, #tpu.memory_space<vmem>>, %arg2: memref<128x32xbf16, #tpu.memory_space<vmem>>, %arg3: memref<128x32xbf16, #tpu.memory_space<vmem>>, %arg4: memref<128x32xbf16, #tpu.memory_space<vmem>>, %arg5: memref<64x32xbf16, #tpu.memory_space<vmem>>, %arg6: memref<32x32xbf16, #tpu.memory_space<vmem>>, %arg7: memref<32x32xbf16, #tpu.memory_space<vmem>>, %arg8: memref<32x32xbf16, #tpu.memory_space<vmem>>, %arg9: memref<32x128xf32, #tpu.memory_space<vmem>>) attributes {dimension_semantics = [#tpu.dimension_semantics<parallel>], iteration_bounds = array<i64: 1>, scalar_prefetch = 0 : i64, scratch_operands = 0 : i64, tpu.core_type = #tpu.core_type<tc>, window_params = [{transform_indices = @transform_0, window_bounds = array<i64: 128, 64>}, {transform_indices = @transform_1, window_bounds = array<i64: 128, 32>}, {transform_indices = @transform_2, window_bounds = array<i64: 128, 32>}, {transform_indices = @transform_3, window_bounds = array<i64: 128, 32>}, {pipeline_mode = #tpu.pipeline_mode<synchronous>, transform_indices = @transform_4, window_bounds = array<i64: 64, 32>}, {pipeline_mode = #tpu.pipeline_mode<synchronous>, transform_indices = @transform_5, window_bounds = array<i64: 32, 32>}, {pipeline_mode = #tpu.pipeline_mode<synchronous>, transform_indices = @transform_6, window_bounds = array<i64: 32, 32>}, {pipeline_mode = #tpu.pipeline_mode<synchronous>, transform_indices = @transform_7, window_bounds = array<i64: 32, 32>}, {transform_indices = @transform_8, window_bounds = array<i64: 32, 128>}]} {
    %c0 = arith.constant 0 : index
    %c0_0 = arith.constant 0 : index
    %0 = vector.load %arg1[%c0, %c0_0] : memref<128x64xbf16, #tpu.memory_space<vmem>>, vector<128x64xbf16>
    %c0_1 = arith.constant 0 : index
    %c0_2 = arith.constant 0 : index
    %1 = vector.load %arg5[%c0_1, %c0_2] : memref<64x32xbf16, #tpu.memory_space<vmem>>, vector<64x32xbf16>
    %cst = arith.constant dense<0.000000e+00> : vector<128x32xf32>
    %2 = tpu.matmul %0, %1, %cst {dimension_numbers = #tpu.dot_dimension_numbers<[1], [0], [0], [1], [0, 0, 1, 1], [], []>} : vector<128x64xbf16>, vector<64x32xbf16>, vector<128x32xf32> -> vector<128x32xf32>
    %c0_3 = arith.constant 0 : index
    %c0_4 = arith.constant 0 : index
    %3 = vector.load %arg2[%c0_3, %c0_4] : memref<128x32xbf16, #tpu.memory_space<vmem>>, vector<128x32xbf16>
    %c0_5 = arith.constant 0 : index
    %c0_6 = arith.constant 0 : index
    %4 = vector.load %arg6[%c0_5, %c0_6] : memref<32x32xbf16, #tpu.memory_space<vmem>>, vector<32x32xbf16>
    %cst_7 = arith.constant dense<0.000000e+00> : vector<128x32xf32>
    %5 = tpu.matmul %3, %4, %cst_7 {dimension_numbers = #tpu.dot_dimension_numbers<[1], [0], [0], [1], [0, 0, 1, 1], [], []>} : vector<128x32xbf16>, vector<32x32xbf16>, vector<128x32xf32> -> vector<128x32xf32>
    %6 = arith.addf %2, %5 : vector<128x32xf32>
    %c0_8 = arith.constant 0 : index
    %c0_9 = arith.constant 0 : index
    %7 = vector.load %arg3[%c0_8, %c0_9] : memref<128x32xbf16, #tpu.memory_space<vmem>>, vector<128x32xbf16>
    %c0_10 = arith.constant 0 : index
    %c0_11 = arith.constant 0 : index
    %8 = vector.load %arg7[%c0_10, %c0_11] : memref<32x32xbf16, #tpu.memory_space<vmem>>, vector<32x32xbf16>
    %cst_12 = arith.constant dense<0.000000e+00> : vector<128x32xf32>
    %9 = tpu.matmul %7, %8, %cst_12 {dimension_numbers = #tpu.dot_dimension_numbers<[1], [0], [0], [1], [0, 0, 1, 1], [], []>} : vector<128x32xbf16>, vector<32x32xbf16>, vector<128x32xf32> -> vector<128x32xf32>
    %10 = arith.addf %6, %9 : vector<128x32xf32>
    %c0_13 = arith.constant 0 : index
    %c0_14 = arith.constant 0 : index
    %11 = vector.load %arg4[%c0_13, %c0_14] : memref<128x32xbf16, #tpu.memory_space<vmem>>, vector<128x32xbf16>
    %c0_15 = arith.constant 0 : index
    %c0_16 = arith.constant 0 : index
    %12 = vector.load %arg8[%c0_15, %c0_16] : memref<32x32xbf16, #tpu.memory_space<vmem>>, vector<32x32xbf16>
    %cst_17 = arith.constant dense<0.000000e+00> : vector<128x32xf32>
    %13 = tpu.matmul %11, %12, %cst_17 {dimension_numbers = #tpu.dot_dimension_numbers<[1], [0], [0], [1], [0, 0, 1, 1], [], []>} : vector<128x32xbf16>, vector<32x32xbf16>, vector<128x32xf32> -> vector<128x32xf32>
    %14 = arith.addf %10, %13 : vector<128x32xf32>
    %15 = tpu.transpose %14, [1, 0] : vector<128x32xf32> -> vector<32x128xf32>
    %cst_18 = arith.constant 0.000000e+00 : f32
    %16 = vector.broadcast %cst_18 : f32 to vector<32x128xf32>
    %17 = arith.maximumf %15, %16 : vector<32x128xf32>
    %c0_19 = arith.constant 0 : index
    %c0_20 = arith.constant 0 : index
    %18 = vector.load %arg9[%c0_19, %c0_20] : memref<32x128xf32, #tpu.memory_space<vmem>>, vector<32x128xf32>
    tpu.vector_store %arg9[%c0_19, %c0_20], %17 {strides = array<i32>} : memref<32x128xf32, #tpu.memory_space<vmem>>, vector<32x128xf32>,
    return
  }
  func.func @transform_0(%arg0: i32) -> (i32, i32) {
    %c0_i32 = arith.constant 0 : i32
    %c0_i32_0 = arith.constant 0 : i32
    return %arg0, %c0_i32 : i32, i32
  }
  func.func @transform_1(%arg0: i32) -> (i32, i32) {
    %c0_i32 = arith.constant 0 : i32
    %c0_i32_0 = arith.constant 0 : i32
    return %arg0, %c0_i32 : i32, i32
  }
  func.func @transform_2(%arg0: i32) -> (i32, i32) {
    %c0_i32 = arith.constant 0 : i32
    %c0_i32_0 = arith.constant 0 : i32
    return %arg0, %c0_i32 : i32, i32
  }
  func.func @transform_3(%arg0: i32) -> (i32, i32) {
    %c0_i32 = arith.constant 0 : i32
    %c0_i32_0 = arith.constant 0 : i32
    return %arg0, %c0_i32 : i32, i32
  }
  func.func @transform_4(%arg0: i32) -> (i32, i32) {
    %c0_i32 = arith.constant 0 : i32
    %c0_i32_0 = arith.constant 0 : i32
    %c0_i32_1 = arith.constant 0 : i32
    return %c0_i32, %c0_i32_0 : i32, i32
  }
  func.func @transform_5(%arg0: i32) -> (i32, i32) {
    %c0_i32 = arith.constant 0 : i32
    %c0_i32_0 = arith.constant 0 : i32
    %c0_i32_1 = arith.constant 0 : i32
    return %c0_i32, %c0_i32_0 : i32, i32
  }
  func.func @transform_6(%arg0: i32) -> (i32, i32) {
    %c0_i32 = arith.constant 0 : i32
    %c0_i32_0 = arith.constant 0 : i32
    %c0_i32_1 = arith.constant 0 : i32
    return %c0_i32, %c0_i32_0 : i32, i32
  }
  func.func @transform_7(%arg0: i32) -> (i32, i32) {
    %c0_i32 = arith.constant 0 : i32
    %c0_i32_0 = arith.constant 0 : i32
    %c0_i32_1 = arith.constant 0 : i32
    return %c0_i32, %c0_i32_0 : i32, i32
  }
  func.func @transform_8(%arg0: i32) -> (i32, i32) {
    %c0_i32 = arith.constant 0 : i32
    %c0_i32_0 = arith.constant 0 : i32
    return %c0_i32, %arg0 : i32, i32
  }
}

</mosaic_0001>

<llo_original>
// kernel: tpu_custom_call.1
$region0: #{tpu_custom_call.1}
  #allocation0 [shape = 'u32[]', space=smem, size = 0x4, offset = 0x4, fixed_abs, tag = 'smem constant byte address 0x4 - core index']
  #allocation1 [shape = 'u32[144,128]{1,0:T(1,128)}', space=vmem, size = 0x12000, scoped, tag = 'internal scratch']
  %s0 = inlined_call_operand.vmem [shape: bf16[128,64], index: 0, kind: input, shape index: {}]
  %s1 = inlined_call_operand.vmem [shape: bf16[128,32], index: 1, kind: input, shape index: {}]
  %s2 = inlined_call_operand.vmem [shape: bf16[128,32], index: 2, kind: input, shape index: {}]
  %s3 = inlined_call_operand.vmem [shape: bf16[128,32], index: 3, kind: input, shape index: {}]
  %s4 = inlined_call_operand.vmem [shape: bf16[64,32], index: 4, kind: input, shape index: {}]
  %s5 = inlined_call_operand.vmem [shape: bf16[32,32], index: 5, kind: input, shape index: {}]
  %s6 = inlined_call_operand.vmem [shape: bf16[32,32], index: 6, kind: input, shape index: {}]
  %s7 = inlined_call_operand.vmem [shape: bf16[32,32], index: 7, kind: input, shape index: {}]
  %s8 = inlined_call_operand.hbm [shape: f32[32,128], index: 8, kind: output, shape index: {}]
  %s9 = sld [smem:[#allocation0]]
  $region42: #{tpu_custom_call.1} parent=0
    _
  %s11 = ssub.s32 1, %s9
  %s12 = scalar_select 0, %s11, %s9
  $region1: #{tpu_custom_call.1} parent=0
    #allocation2 [shape = 'u8[16384]{0}', space=vmem, size = 0x4000, scoped, tag = 'output window, operand 0, single buffered']
    #allocation3 [shape = 's32[1]{0}', space=sflag, size = 0x4, scoped, tag = 'scoped memory for tpu_custom_call.1']
    %13 = vsyncpa [#allocation3], 0
    // Predicated region
    $region2: #{tpu_custom_call.1} parent=1 // pred_check
      _
    $region3: #{tpu_custom_call.1} parent=1 // pred_check_branch
      %15 = sbr.rel (0) target = $region5
    $region4: #{tpu_custom_call.1} parent=1 // pred_region
      _
    $region5: #{tpu_custom_call.1} parent=1 // pred_fallthru
      _
    // Predicated region
    $region6: #{tpu_custom_call.1} parent=1 // pred_check
      _
    $region7: #{tpu_custom_call.1} parent=1 // pred_check_branch
      %17 = sbr.rel (0) target = $region9
    $region8: #{tpu_custom_call.1} parent=1 // pred_region
      _
    $region9: #{tpu_custom_call.1} parent=1 // pred_fallthru
      _
    // Predicated region
    $region10: #{tpu_custom_call.1} parent=1 // pred_check
      _
    $region11: #{tpu_custom_call.1} parent=1 // pred_check_branch
      %19 = sbr.rel (0) target = $region13
    $region12: #{tpu_custom_call.1} parent=1 // pred_region
      _
    $region13: #{tpu_custom_call.1} parent=1 // pred_fallthru
      _
    // Predicated region
    $region14: #{tpu_custom_call.1} parent=1 // pred_check
      _
    $region15: #{tpu_custom_call.1} parent=1 // pred_check_branch
      %21 = sbr.rel (0) target = $region17
    $region16: #{tpu_custom_call.1} parent=1 // pred_region
      _
    $region17: #{tpu_custom_call.1} parent=1 // pred_fallthru
      _
    // Predicated region
    $region18: #{tpu_custom_call.1} parent=1 // pred_check
      _
    $region19: #{tpu_custom_call.1} parent=1 // pred_check_branch
      %23 = sbr.rel (0) target = $region21
    $region20: #{tpu_custom_call.1} parent=1 // pred_region
      _
    $region21: #{tpu_custom_call.1} parent=1 // pred_fallthru
      _
    // Predicated region
    $region22: #{tpu_custom_call.1} parent=1 // pred_check
      _
    $region23: #{tpu_custom_call.1} parent=1 // pred_check_branch
      %25 = sbr.rel (0) target = $region25
    $region24: #{tpu_custom_call.1} parent=1 // pred_region
      _
    $region25: #{tpu_custom_call.1} parent=1 // pred_fallthru
      _
    // Predicated region
    $region26: #{tpu_custom_call.1} parent=1 // pred_check
      _
    $region27: #{tpu_custom_call.1} parent=1 // pred_check_branch
      %27 = sbr.rel (0) target = $region29
    $region28: #{tpu_custom_call.1} parent=1 // pred_region
      _
    $region29: #{tpu_custom_call.1} parent=1 // pred_fallthru
      _
    // Predicated region
    $region30: #{tpu_custom_call.1} parent=1 // pred_check
      _
    $region31: #{tpu_custom_call.1} parent=1 // pred_check_branch
      %29 = sbr.rel (0) target = $region33
    $region32: #{tpu_custom_call.1} parent=1 // pred_region
      _
    $region33: #{tpu_custom_call.1} parent=1 // pred_fallthru
      _
    %v31 = vld [vmem:[%s0] sm:$0xf]
    %v32 = vld [vmem:[%s0 + $0x4] sm:$0xf]
    %v33 = vld [vmem:[%s0 + $0x8] sm:$0xf]
    %v34 = vld [vmem:[%s0 + $0xc] sm:$0xf]
    %v35 = vld [vmem:[%s0 + $0x10] sm:$0xf]
    %v36 = vld [vmem:[%s0 + $0x14] sm:$0xf]
    %v37 = vld [vmem:[%s0 + $0x18] sm:$0xf]
    %v38 = vld [vmem:[%s0 + $0x1c] sm:$0xf]
    %v39 = vld [vmem:[%s0 + $0x20] sm:$0xf]
    %v40 = vld [vmem:[%s0 + $0x24] sm:$0xf]
    %v41 = vld [vmem:[%s0 + $0x28] sm:$0xf]
    %v42 = vld [vmem:[%s0 + $0x2c] sm:$0xf]
    %v43 = vld [vmem:[%s0 + $0x30] sm:$0xf]
    %v44 = vld [vmem:[%s0 + $0x34] sm:$0xf]
    %v45 = vld [vmem:[%s0 + $0x38] sm:$0xf]
    %v46 = vld [vmem:[%s0 + $0x3c] sm:$0xf]
    %v47 = vld [vmem:[%s4] sm:$0xf]
    %v48 = vld [vmem:[%s4 + $0x4] sm:$0xf]
    %v49 = vld [vmem:[%s4 + $0x8] sm:$0xf]
    %v50 = vld [vmem:[%s4 + $0xc] sm:$0xf]
    %v51 = vld [vmem:[%s4 + $0x10] sm:$0xf]
    %v52 = vld [vmem:[%s4 + $0x14] sm:$0xf]
    %v53 = vld [vmem:[%s4 + $0x18] sm:$0xf]
    %v54 = vld [vmem:[%s4 + $0x1c] sm:$0xf]
    %v55 = vld [vmem:[%s1] sm:$0xf]
    %v56 = vld [vmem:[%s1 + $0x4] sm:$0xf]
    %v57 = vld [vmem:[%s1 + $0x8] sm:$0xf]
    %v58 = vld [vmem:[%s1 + $0xc] sm:$0xf]
    %v59 = vld [vmem:[%s1 + $0x10] sm:$0xf]
    %v60 = vld [vmem:[%s1 + $0x14] sm:$0xf]
    %v61 = vld [vmem:[%s1 + $0x18] sm:$0xf]
    %v62 = vld [vmem:[%s1 + $0x1c] sm:$0xf]
    %v63 = vld [vmem:[%s1 + $0x20] sm:$0xf]
    %v64 = vld [vmem:[%s1 + $0x24] sm:$0xf]
    %v65 = vld [vmem:[%s1 + $0x28] sm:$0xf]
    %v66 = vld [vmem:[%s1 + $0x2c] sm:$0xf]
    %v67 = vld [vmem:[%s1 + $0x30] sm:$0xf]
    %v68 = vld [vmem:[%s1 + $0x34] sm:$0xf]
    %v69 = vld [vmem:[%s1 + $0x38] sm:$0xf]
    %v70 = vld [vmem:[%s1 + $0x3c] sm:$0xf]
    %v71 = vld [vmem:[%s5] sm:$0xf]
    %v72 = vld [vmem:[%s5 + $0x4] sm:$0xf]
    %v73 = vld [vmem:[%s5 + $0x8] sm:$0xf]
    %v74 = vld [vmem:[%s5 + $0xc] sm:$0xf]
    %v91 = vunpack.c.l.b16 %v55
    %v92 = vunpack.c.l.b16 %v56
    %v93 = vunpack.c.l.b16 %v57
    %v94 = vunpack.c.l.b16 %v58
    %v95 = vunpack.c.l.b16 %v59
    %v96 = vunpack.c.l.b16 %v60
    %v97 = vunpack.c.l.b16 %v61
    %v98 = vunpack.c.l.b16 %v62
    %v99 = vunpack.c.l.b16 %v63
    %v100 = vunpack.c.l.b16 %v64
    %v101 = vunpack.c.l.b16 %v65
    %v102 = vunpack.c.l.b16 %v66
    %v103 = vunpack.c.l.b16 %v67
    %v104 = vunpack.c.l.b16 %v68
    %v105 = vunpack.c.l.b16 %v69
    %v106 = vunpack.c.l.b16 %v70
    %v107 = vpack.c.b16 %v92, %v91
    %v108 = vpack.c.b16 %v94, %v93
    %v109 = vpack.c.b16 %v96, %v95
    %v110 = vpack.c.b16 %v98, %v97
    %v111 = vpack.c.b16 %v100, %v99
    %v112 = vpack.c.b16 %v102, %v101
    %v113 = vpack.c.b16 %v104, %v103
    %v114 = vpack.c.b16 %v106, %v105
    %v119 = vunpack.c.l.b16 %v71
    %v120 = vunpack.c.l.b16 %v72
    %v121 = vunpack.c.l.b16 %v73
    %v122 = vunpack.c.l.b16 %v74
    %v123 = vpack.c.b16 %v120, %v119
    %v124 = vpack.c.b16 %v122, %v121
    %vm127 = vcmask 261120
    %v129 = vsel %vm127, %v107, 0
    %v132 = vsel %vm127, %v108, 0
    %v135 = vsel %vm127, %v109, 0
    %v138 = vsel %vm127, %v110, 0
    %v141 = vsel %vm127, %v111, 0
    %v144 = vsel %vm127, %v112, 0
    %v147 = vsel %vm127, %v113, 0
    %v150 = vsel %vm127, %v114, 0
    %152 = vmatprep.subr.bf16.mxu0 0
    %153 = vmatpush1.bf16.msra.mxu0 %v123
    %154 = vmatprep.subr.bf16.mxu0 0
    %155 = vmatpush1.bf16.msra.mxu0 %v124
    %156 = vmatprep.subr.bf16.mxu0 0
    %157 = vmatpush1.bf16.msra.mxu0 0
    %158 = vmatprep.subr.bf16.mxu0 0
    %159 = vmatpush1.bf16.msra.mxu0 0
    %160 = vmatprep.subr.bf16.mxu0 0
    %161 = vmatpush1.bf16.msra.mxu0 0
    %162 = vmatprep.subr.bf16.mxu0 0
    %163 = vmatpush1.bf16.msra.mxu0 0
    %164 = vmatprep.subr.bf16.mxu0 0
    %165 = vmatpush1.bf16.msra.mxu0 0
    %166 = vmatprep.subr.bf16.mxu0 0
    %167 = vmatpush1.bf16.msra.mxu0 0
    %168 = vmatprep.subr.bf16.mxu0 0
    %169 = vmatpush1.bf16.msra.mxu0 0
    %170 = vmatprep.subr.bf16.mxu0 0
    %171 = vmatpush1.bf16.msra.mxu0 0
    %172 = vmatprep.subr.bf16.mxu0 0
    %173 = vmatpush1.bf16.msra.mxu0 0
    %174 = vmatprep.subr.bf16.mxu0 0
    %175 = vmatpush1.bf16.msra.mxu0 0
    %176 = vmatprep.subr.bf16.mxu0 0
    %177 = vmatpush1.bf16.msra.mxu0 0
    %178 = vmatprep.subr.bf16.mxu0 0
    %179 = vmatpush1.bf16.msra.mxu0 0
    %180 = vmatprep.subr.bf16.mxu0 0
    %181 = vmatpush1.bf16.msra.mxu0 0
    %182 = vmatprep.subr.bf16.mxu0 0
    %183 = vmatpush1.bf16.msra.mxu0 0
    %184 = vmatprep.mubr.bf16.mxu0 0
    %185 = vmatmul.mubr.bf16.gmra.mrb[0].mxu0 %v129
    %v186 = vpop.f32.mrb[0].mxu0
    %v187 = vadd.f32 0.0, %v186
    %v188 = vpop.f32.mrb[0].mxu0
    %v189 = vpop.f32.mrb[0].mxu0
    %v190 = vadd.f32 0.0, %v189
    %v191 = vpop.f32.mrb[0].mxu0
    %192 = vmatprep.mubr.bf16.mxu0 0
    %193 = vmatmul.mubr.bf16.gmra.mrb[0].mxu0 %v132
    %v194 = vpop.f32.mrb[0].mxu0
    %v195 = vadd.f32 0.0, %v194
    %v196 = vpop.f32.mrb[0].mxu0
    %v197 = vpop.f32.mrb[0].mxu0
    %v198 = vadd.f32 0.0, %v197
    %v199 = vpop.f32.mrb[0].mxu0
    %200 = vmatprep.mubr.bf16.mxu0 0
    %201 = vmatmul.mubr.bf16.gmra.mrb[0].mxu0 %v135
    %v202 = vpop.f32.mrb[0].mxu0
    %v203 = vadd.f32 0.0, %v202
    %v204 = vpop.f32.mrb[0].mxu0
    %v205 = vpop.f32.mrb[0].mxu0
    %v206 = vadd.f32 0.0, %v205
    %v207 = vpop.f32.mrb[0].mxu0
    %208 = vmatprep.mubr.bf16.mxu0 0
    %209 = vmatmul.mubr.bf16.gmra.mrb[0].mxu0 %v138
    %v210 = vpop.f32.mrb[0].mxu0
    %v211 = vadd.f32 0.0, %v210
    %v212 = vpop.f32.mrb[0].mxu0
    %v213 = vpop.f32.mrb[0].mxu0
    %v214 = vadd.f32 0.0, %v213
    %v215 = vpop.f32.mrb[0].mxu0
    %216 = vmatprep.mubr.bf16.mxu0 0
    %217 = vmatmul.mubr.bf16.gmra.mrb[0].mxu0 %v141
    %v218 = vpop.f32.mrb[0].mxu0
    %v219 = vadd.f32 0.0, %v218
    %v220 = vpop.f32.mrb[0].mxu0
    %v221 = vpop.f32.mrb[0].mxu0
    %v222 = vadd.f32 0.0, %v221
    %v223 = vpop.f32.mrb[0].mxu0
    %224 = vmatprep.mubr.bf16.mxu0 0
    %225 = vmatmul.mubr.bf16.gmra.mrb[0].mxu0 %v144
    %v226 = vpop.f32.mrb[0].mxu0
    %v227 = vadd.f32 0.0, %v226
    %v228 = vpop.f32.mrb[0].mxu0
    %v229 = vpop.f32.mrb[0].mxu0
    %v230 = vadd.f32 0.0, %v229
    %v231 = vpop.f32.mrb[0].mxu0
    %232 = vmatprep.mubr.bf16.mxu0 0
    %233 = vmatmul.mubr.bf16.gmra.mrb[0].mxu0 %v147
    %v234 = vpop.f32.mrb[0].mxu0
    %v235 = vadd.f32 0.0, %v234
    %v236 = vpop.f32.mrb[0].mxu0
    %v237 = vpop.f32.mrb[0].mxu0
    %v238 = vadd.f32 0.0, %v237
    %v239 = vpop.f32.mrb[0].mxu0
    %240 = vmatprep.mubr.bf16.mxu0 0
    %241 = vmatmul.mubr.bf16.gmra.mrb[0].mxu0 %v150
    %v242 = vpop.f32.mrb[0].mxu0
    %v243 = vadd.f32 0.0, %v242
    %v244 = vpop.f32.mrb[0].mxu0
    %v245 = vpop.f32.mrb[0].mxu0
    %v246 = vadd.f32 0.0, %v245
    %v247 = vpop.f32.mrb[0].mxu0
    %248 = vdwg.mxu0
    %v265 = vunpack.c.l.b16 %v31
    %v266 = vunpack.c.l.b16 %v32
    %v267 = vunpack.c.l.b16 %v33
    %v268 = vunpack.c.l.b16 %v34
    %v269 = vunpack.c.l.b16 %v35
    %v270 = vunpack.c.l.b16 %v36
    %v271 = vunpack.c.l.b16 %v37
    %v272 = vunpack.c.l.b16 %v38
    %v273 = vunpack.c.l.b16 %v39
    %v274 = vunpack.c.l.b16 %v40
    %v275 = vunpack.c.l.b16 %v41
    %v276 = vunpack.c.l.b16 %v42
    %v277 = vunpack.c.l.b16 %v43
    %v278 = vunpack.c.l.b16 %v44
    %v279 = vunpack.c.l.b16 %v45
    %v280 = vunpack.c.l.b16 %v46
    %v281 = vpack.c.b16 %v266, %v265
    %v282 = vpack.c.b16 %v268, %v267
    %v283 = vpack.c.b16 %v270, %v269
    %v284 = vpack.c.b16 %v272, %v271
    %v285 = vpack.c.b16 %v274, %v273
    %v286 = vpack.c.b16 %v276, %v275
    %v287 = vpack.c.b16 %v278, %v277
    %v288 = vpack.c.b16 %v280, %v279
    %v297 = vunpack.c.l.b16 %v47
    %v298 = vunpack.c.l.b16 %v48
    %v299 = vunpack.c.l.b16 %v49
    %v300 = vunpack.c.l.b16 %v50
    %v301 = vunpack.c.l.b16 %v51
    %v302 = vunpack.c.l.b16 %v52
    %v303 = vunpack.c.l.b16 %v53
    %v304 = vunpack.c.l.b16 %v54
    %v305 = vpack.c.b16 %v298, %v297
    %v306 = vpack.c.b16 %v300, %v299
    %v307 = vpack.c.b16 %v302, %v301
    %v308 = vpack.c.b16 %v304, %v303
    %vm313 = vcmask 523264
    %v315 = vsel %vm313, %v281, 0
    %v318 = vsel %vm313, %v282, 0
    %v321 = vsel %vm313, %v283, 0
    %v324 = vsel %vm313, %v284, 0
    %v327 = vsel %vm313, %v285, 0
    %v330 = vsel %vm313, %v286, 0
    %v333 = vsel %vm313, %v287, 0
    %v336 = vsel %vm313, %v288, 0
    %338 = vmatprep.subr.bf16.mxu0 0
    %339 = vmatpush1.bf16.msra.mxu0 %v305
    %340 = vmatprep.subr.bf16.mxu0 0
    %341 = vmatpush1.bf16.msra.mxu0 %v306
    %342 = vmatprep.subr.bf16.mxu0 0
    %343 = vmatpush1.bf16.msra.mxu0 %v307
    %344 = vmatprep.subr.bf16.mxu0 0
    %345 = vmatpush1.bf16.msra.mxu0 %v308
    %346 = vmatprep.subr.bf16.mxu0 0
    %347 = vmatpush1.bf16.msra.mxu0 0
    %348 = vmatprep.subr.bf16.mxu0 0
    %349 = vmatpush1.bf16.msra.mxu0 0
    %350 = vmatprep.subr.bf16.mxu0 0
    %351 = vmatpush1.bf16.msra.mxu0 0
    %352 = vmatprep.subr.bf16.mxu0 0
    %353 = vmatpush1.bf16.msra.mxu0 0
    %354 = vmatprep.subr.bf16.mxu0 0
    %355 = vmatpush1.bf16.msra.mxu0 0
    %356 = vmatprep.subr.bf16.mxu0 0
    %357 = vmatpush1.bf16.msra.mxu0 0
    %358 = vmatprep.subr.bf16.mxu0 0
    %359 = vmatpush1.bf16.msra.mxu0 0
    %360 = vmatprep.subr.bf16.mxu0 0
    %361 = vmatpush1.bf16.msra.mxu0 0
    %362 = vmatprep.subr.bf16.mxu0 0
    %363 = vmatpush1.bf16.msra.mxu0 0
    %364 = vmatprep.subr.bf16.mxu0 0
    %365 = vmatpush1.bf16.msra.mxu0 0
    %366 = vmatprep.subr.bf16.mxu0 0
    %367 = vmatpush1.bf16.msra.mxu0 0
    %368 = vmatprep.subr.bf16.mxu0 0
    %369 = vmatpush1.bf16.msra.mxu0 0
    %370 = vmatprep.mubr.bf16.mxu0 0
    %371 = vmatmul.mubr.bf16.gmra.mrb[0].mxu0 %v315
    %v372 = vpop.f32.mrb[0].mxu0
    %v373 = vadd.f32 %v187, %v372
    %v374 = vpop.f32.mrb[0].mxu0
    %v375 = vpop.f32.mrb[0].mxu0
    %v376 = vadd.f32 %v190, %v375
    %v377 = vpop.f32.mrb[0].mxu0
    %378 = vmatprep.mubr.bf16.mxu0 0
    %379 = vmatmul.mubr.bf16.gmra.mrb[0].mxu0 %v318
    %v380 = vpop.f32.mrb[0].mxu0
    %v381 = vadd.f32 %v195, %v380
    %v382 = vpop.f32.mrb[0].mxu0
    %v383 = vpop.f32.mrb[0].mxu0
    %v384 = vadd.f32 %v198, %v383
    %v385 = vpop.f32.mrb[0].mxu0
    %386 = vmatprep.mubr.bf16.mxu0 0
    %387 = vmatmul.mubr.bf16.gmra.mrb[0].mxu0 %v321
    %v388 = vpop.f32.mrb[0].mxu0
    %v389 = vadd.f32 %v203, %v388
    %v390 = vpop.f32.mrb[0].mxu0
    %v391 = vpop.f32.mrb[0].mxu0
    %v392 = vadd.f32 %v206, %v391
    %v393 = vpop.f32.mrb[0].mxu0
    %394 = vmatprep.mubr.bf16.mxu0 0
    %395 = vmatmul.mubr.bf16.gmra.mrb[0].mxu0 %v324
    %v396 = vpop.f32.mrb[0].mxu0
    %v397 = vadd.f32 %v211, %v396
    %v398 = vpop.f32.mrb[0].mxu0
    %v399 = vpop.f32.mrb[0].mxu0
    %v400 = vadd.f32 %v214, %v399
    %v401 = vpop.f32.mrb[0].mxu0
    %402 = vmatprep.mubr.bf16.mxu0 0
    %403 = vmatmul.mubr.bf16.gmra.mrb[0].mxu0 %v327
    %v404 = vpop.f32.mrb[0].mxu0
    %v405 = vadd.f32 %v219, %v404
    %v406 = vpop.f32.mrb[0].mxu0
    %v407 = vpop.f32.mrb[0].mxu0
    %v408 = vadd.f32 %v222, %v407
    %v409 = vpop.f32.mrb[0].mxu0
    %410 = vmatprep.mubr.bf16.mxu0 0
    %411 = vmatmul.mubr.bf16.gmra.mrb[0].mxu0 %v330
    %v412 = vpop.f32.mrb[0].mxu0
    %v413 = vadd.f32 %v227, %v412
    %v414 = vpop.f32.mrb[0].mxu0
    %v415 = vpop.f32.mrb[0].mxu0
    %v416 = vadd.f32 %v230, %v415
    %v417 = vpop.f32.mrb[0].mxu0
    %418 = vmatprep.mubr.bf16.mxu0 0
    %419 = vmatmul.mubr.bf16.gmra.mrb[0].mxu0 %v333
    %v420 = vpop.f32.mrb[0].mxu0
    %v421 = vadd.f32 %v235, %v420
    %v422 = vpop.f32.mrb[0].mxu0
    %v423 = vpop.f32.mrb[0].mxu0
    %v424 = vadd.f32 %v238, %v423
    %v425 = vpop.f32.mrb[0].mxu0
    %426 = vmatprep.mubr.bf16.mxu0 0
    %427 = vmatmul.mubr.bf16.gmra.mrb[0].mxu0 %v336
    %v428 = vpop.f32.mrb[0].mxu0
    %v429 = vadd.f32 %v243, %v428
    %v430 = vpop.f32.mrb[0].mxu0
    %v431 = vpop.f32.mrb[0].mxu0
    %v432 = vadd.f32 %v246, %v431
    %v433 = vpop.f32.mrb[0].mxu0
    %434 = vdwg.mxu0
    %v435 = vld [vmem:[%s2] sm:$0xf]
    %v436 = vld [vmem:[%s2 + $0x4] sm:$0xf]
    %v437 = vld [vmem:[%s2 + $0x8] sm:$0xf]
    %v438 = vld [vmem:[%s2 + $0xc] sm:$0xf]
    %v439 = vld [vmem:[%s2 + $0x10] sm:$0xf]
    %v440 = vld [vmem:[%s2 + $0x14] sm:$0xf]
    %v441 = vld [vmem:[%s2 + $0x18] sm:$0xf]
    %v442 = vld [vmem:[%s2 + $0x1c] sm:$0xf]
    %v443 = vld [vmem:[%s2 + $0x20] sm:$0xf]
    %v444 = vld [vmem:[%s2 + $0x24] sm:$0xf]
    %v445 = vld [vmem:[%s2 + $0x28] sm:$0xf]
    %v446 = vld [vmem:[%s2 + $0x2c] sm:$0xf]
    %v447 = vld [vmem:[%s2 + $0x30] sm:$0xf]
    %v448 = vld [vmem:[%s2 + $0x34] sm:$0xf]
    %v449 = vld [vmem:[%s2 + $0x38] sm:$0xf]
    %v450 = vld [vmem:[%s2 + $0x3c] sm:$0xf]
    %v451 = vld [vmem:[%s6] sm:$0xf]
    %v452 = vld [vmem:[%s6 + $0x4] sm:$0xf]
    %v453 = vld [vmem:[%s6 + $0x8] sm:$0xf]
    %v454 = vld [vmem:[%s6 + $0xc] sm:$0xf]
    %v471 = vunpack.c.l.b16 %v435
    %v472 = vunpack.c.l.b16 %v436
    %v473 = vunpack.c.l.b16 %v437
    %v474 = vunpack.c.l.b16 %v438
    %v475 = vunpack.c.l.b16 %v439
    %v476 = vunpack.c.l.b16 %v440
    %v477 = vunpack.c.l.b16 %v441
    %v478 = vunpack.c.l.b16 %v442
    %v479 = vunpack.c.l.b16 %v443
    %v480 = vunpack.c.l.b16 %v444
    %v481 = vunpack.c.l.b16 %v445
    %v482 = vunpack.c.l.b16 %v446
    %v483 = vunpack.c.l.b16 %v447
    %v484 = vunpack.c.l.b16 %v448
    %v485 = vunpack.c.l.b16 %v449
    %v486 = vunpack.c.l.b16 %v450
    %v487 = vpack.c.b16 %v472, %v471
    %v488 = vpack.c.b16 %v474, %v473
    %v489 = vpack.c.b16 %v476, %v475
    %v490 = vpack.c.b16 %v478, %v477
    %v491 = vpack.c.b16 %v480, %v479
    %v492 = vpack.c.b16 %v482, %v481
    %v493 = vpack.c.b16 %v484, %v483
    %v494 = vpack.c.b16 %v486, %v485
    %v499 = vunpack.c.l.b16 %v451
    %v500 = vunpack.c.l.b16 %v452
    %v501 = vunpack.c.l.b16 %v453
    %v502 = vunpack.c.l.b16 %v454
    %v503 = vpack.c.b16 %v500, %v499
    %v504 = vpack.c.b16 %v502, %v501
    %v508 = vsel %vm127, %v487, 0
    %v511 = vsel %vm127, %v488, 0
    %v514 = vsel %vm127, %v489, 0
    %v517 = vsel %vm127, %v490, 0
    %v520 = vsel %vm127, %v491, 0
    %v523 = vsel %vm127, %v492, 0
    %v526 = vsel %vm127, %v493, 0
    %v529 = vsel %vm127, %v494, 0
    %531 = vmatprep.subr.bf16.mxu0 0
    %532 = vmatpush1.bf16.msra.mxu0 %v503
    %533 = vmatprep.subr.bf16.mxu0 0
    %534 = vmatpush1.bf16.msra.mxu0 %v504
    %535 = vmatprep.subr.bf16.mxu0 0
    %536 = vmatpush1.bf16.msra.mxu0 0
    %537 = vmatprep.subr.bf16.mxu0 0
    %538 = vmatpush1.bf16.msra.mxu0 0
    %539 = vmatprep.subr.bf16.mxu0 0
    %540 = vmatpush1.bf16.msra.mxu0 0
    %541 = vmatprep.subr.bf16.mxu0 0
    %542 = vmatpush1.bf16.msra.mxu0 0
    %543 = vmatprep.subr.bf16.mxu0 0
    %544 = vmatpush1.bf16.msra.mxu0 0
    %545 = vmatprep.subr.bf16.mxu0 0
    %546 = vmatpush1.bf16.msra.mxu0 0
    %547 = vmatprep.subr.bf16.mxu0 0
    %548 = vmatpush1.bf16.msra.mxu0 0
    %549 = vmatprep.subr.bf16.mxu0 0
    %550 = vmatpush1.bf16.msra.mxu0 0
    %551 = vmatprep.subr.bf16.mxu0 0
    %552 = vmatpush1.bf16.msra.mxu0 0
    %553 = vmatprep.subr.bf16.mxu0 0
    %554 = vmatpush1.bf16.msra.mxu0 0
    %555 = vmatprep.subr.bf16.mxu0 0
    %556 = vmatpush1.bf16.msra.mxu0 0
    %557 = vmatprep.subr.bf16.mxu0 0
    %558 = vmatpush1.bf16.msra.mxu0 0
    %559 = vmatprep.subr.bf16.mxu0 0
    %560 = vmatpush1.bf16.msra.mxu0 0
    %561 = vmatprep.subr.bf16.mxu0 0
    %562 = vmatpush1.bf16.msra.mxu0 0
    %563 = vmatprep.mubr.bf16.mxu0 0
    %564 = vmatmul.mubr.bf16.gmra.mrb[0].mxu0 %v508
    %v565 = vpop.f32.mrb[0].mxu0
    %v566 = vadd.f32 0.0, %v565
    %v567 = vpop.f32.mrb[0].mxu0
    %v568 = vpop.f32.mrb[0].mxu0
    %v569 = vadd.f32 0.0, %v568
    %v570 = vpop.f32.mrb[0].mxu0
    %571 = vmatprep.mubr.bf16.mxu0 0
    %572 = vmatmul.mubr.bf16.gmra.mrb[0].mxu0 %v511
    %v573 = vpop.f32.mrb[0].mxu0
    %v574 = vadd.f32 0.0, %v573
    %v575 = vpop.f32.mrb[0].mxu0
    %v576 = vpop.f32.mrb[0].mxu0
    %v577 = vadd.f32 0.0, %v576
    %v578 = vpop.f32.mrb[0].mxu0
    %579 = vmatprep.mubr.bf16.mxu0 0
    %580 = vmatmul.mubr.bf16.gmra.mrb[0].mxu0 %v514
    %v581 = vpop.f32.mrb[0].mxu0
    %v582 = vadd.f32 0.0, %v581
    %v583 = vpop.f32.mrb[0].mxu0
    %v584 = vpop.f32.mrb[0].mxu0
    %v585 = vadd.f32 0.0, %v584
    %v586 = vpop.f32.mrb[0].mxu0
    %587 = vmatprep.mubr.bf16.mxu0 0
    %588 = vmatmul.mubr.bf16.gmra.mrb[0].mxu0 %v517
    %v589 = vpop.f32.mrb[0].mxu0
    %v590 = vadd.f32 0.0, %v589
    %v591 = vpop.f32.mrb[0].mxu0
    %v592 = vpop.f32.mrb[0].mxu0
    %v593 = vadd.f32 0.0, %v592
    %v594 = vpop.f32.mrb[0].mxu0
    %595 = vmatprep.mubr.bf16.mxu0 0
    %596 = vmatmul.mubr.bf16.gmra.mrb[0].mxu0 %v520
    %v597 = vpop.f32.mrb[0].mxu0
    %v598 = vadd.f32 0.0, %v597
    %v599 = vpop.f32.mrb[0].mxu0
    %v600 = vpop.f32.mrb[0].mxu0
    %v601 = vadd.f32 0.0, %v600
    %v602 = vpop.f32.mrb[0].mxu0
    %603 = vmatprep.mubr.bf16.mxu0 0
    %604 = vmatmul.mubr.bf16.gmra.mrb[0].mxu0 %v523
    %v605 = vpop.f32.mrb[0].mxu0
    %v606 = vadd.f32 0.0, %v605
    %v607 = vpop.f32.mrb[0].mxu0
    %v608 = vpop.f32.mrb[0].mxu0
    %v609 = vadd.f32 0.0, %v608
    %v610 = vpop.f32.mrb[0].mxu0
    %611 = vmatprep.mubr.bf16.mxu0 0
    %612 = vmatmul.mubr.bf16.gmra.mrb[0].mxu0 %v526
    %v613 = vpop.f32.mrb[0].mxu0
    %v614 = vadd.f32 0.0, %v613
    %v615 = vpop.f32.mrb[0].mxu0
    %v616 = vpop.f32.mrb[0].mxu0
    %v617 = vadd.f32 0.0, %v616
    %v618 = vpop.f32.mrb[0].mxu0
    %619 = vmatprep.mubr.bf16.mxu0 0
    %620 = vmatmul.mubr.bf16.gmra.mrb[0].mxu0 %v529
    %v621 = vpop.f32.mrb[0].mxu0
    %v622 = vadd.f32 0.0, %v621
    %v623 = vpop.f32.mrb[0].mxu0
    %v624 = vpop.f32.mrb[0].mxu0
    %v625 = vadd.f32 0.0, %v624
    %v626 = vpop.f32.mrb[0].mxu0
    %627 = vdwg.mxu0
    %v628 = vadd.f32 %v373, %v566
    %v629 = vadd.f32 %v376, %v569
    %v630 = vadd.f32 %v381, %v574
    %v631 = vadd.f32 %v384, %v577
    %v632 = vadd.f32 %v389, %v582
    %v633 = vadd.f32 %v392, %v585
    %v634 = vadd.f32 %v397, %v590
    %v635 = vadd.f32 %v400, %v593
    %v636 = vadd.f32 %v405, %v598
    %v637 = vadd.f32 %v408, %v601
    %v638 = vadd.f32 %v413, %v606
    %v639 = vadd.f32 %v416, %v609
    %v640 = vadd.f32 %v421, %v614
    %v641 = vadd.f32 %v424, %v617
    %v642 = vadd.f32 %v429, %v622
    %v643 = vadd.f32 %v432, %v625
    %v644 = vld [vmem:[%s3] sm:$0xf]
    %v645 = vld [vmem:[%s3 + $0x4] sm:$0xf]
    %v646 = vld [vmem:[%s3 + $0x8] sm:$0xf]
    %v647 = vld [vmem:[%s3 + $0xc] sm:$0xf]
    %v648 = vld [vmem:[%s3 + $0x10] sm:$0xf]
    %v649 = vld [vmem:[%s3 + $0x14] sm:$0xf]
    %v650 = vld [vmem:[%s3 + $0x18] sm:$0xf]
    %v651 = vld [vmem:[%s3 + $0x1c] sm:$0xf]
    %v652 = vld [vmem:[%s3 + $0x20] sm:$0xf]
    %v653 = vld [vmem:[%s3 + $0x24] sm:$0xf]
    %v654 = vld [vmem:[%s3 + $0x28] sm:$0xf]
    %v655 = vld [vmem:[%s3 + $0x2c] sm:$0xf]
    %v656 = vld [vmem:[%s3 + $0x30] sm:$0xf]
    %v657 = vld [vmem:[%s3 + $0x34] sm:$0xf]
    %v658 = vld [vmem:[%s3 + $0x38] sm:$0xf]
    %v659 = vld [vmem:[%s3 + $0x3c] sm:$0xf]
    %v660 = vld [vmem:[%s7] sm:$0xf]
    %v661 = vld [vmem:[%s7 + $0x4] sm:$0xf]
    %v662 = vld [vmem:[%s7 + $0x8] sm:$0xf]
    %v663 = vld [vmem:[%s7 + $0xc] sm:$0xf]
    %v680 = vunpack.c.l.b16 %v644
    %v681 = vunpack.c.l.b16 %v645
    %v682 = vunpack.c.l.b16 %v646
    %v683 = vunpack.c.l.b16 %v647
    %v684 = vunpack.c.l.b16 %v648
    %v685 = vunpack.c.l.b16 %v649
    %v686 = vunpack.c.l.b16 %v650
    %v687 = vunpack.c.l.b16 %v651
    %v688 = vunpack.c.l.b16 %v652
    %v689 = vunpack.c.l.b16 %v653
    %v690 = vunpack.c.l.b16 %v654
    %v691 = vunpack.c.l.b16 %v655
    %v692 = vunpack.c.l.b16 %v656
    %v693 = vunpack.c.l.b16 %v657
    %v694 = vunpack.c.l.b16 %v658
    %v695 = vunpack.c.l.b16 %v659
    %v696 = vpack.c.b16 %v681, %v680
    %v697 = vpack.c.b16 %v683, %v682
    %v698 = vpack.c.b16 %v685, %v684
    %v699 = vpack.c.b16 %v687, %v686
    %v700 = vpack.c.b16 %v689, %v688
    %v701 = vpack.c.b16 %v691, %v690
    %v702 = vpack.c.b16 %v693, %v692
    %v703 = vpack.c.b16 %v695, %v694
    %v708 = vunpack.c.l.b16 %v660
    %v709 = vunpack.c.l.b16 %v661
    %v710 = vunpack.c.l.b16 %v662
    %v711 = vunpack.c.l.b16 %v663
    %v712 = vpack.c.b16 %v709, %v708
    %v713 = vpack.c.b16 %v711, %v710
    %v717 = vsel %vm127, %v696, 0
    %v720 = vsel %vm127, %v697, 0
    %v723 = vsel %vm127, %v698, 0
    %v726 = vsel %vm127, %v699, 0
    %v729 = vsel %vm127, %v700, 0
    %v732 = vsel %vm127, %v701, 0
    %v735 = vsel %vm127, %v702, 0
    %v738 = vsel %vm127, %v703, 0
    %740 = vmatprep.subr.bf16.mxu0 0
    %741 = vmatpush1.bf16.msra.mxu0 %v712
    %742 = vmatprep.subr.bf16.mxu0 0
    %743 = vmatpush1.bf16.msra.mxu0 %v713
    %744 = vmatprep.subr.bf16.mxu0 0
    %745 = vmatpush1.bf16.msra.mxu0 0
    %746 = vmatprep.subr.bf16.mxu0 0
    %747 = vmatpush1.bf16.msra.mxu0 0
    %748 = vmatprep.subr.bf16.mxu0 0
    %749 = vmatpush1.bf16.msra.mxu0 0
    %750 = vmatprep.subr.bf16.mxu0 0
    %751 = vmatpush1.bf16.msra.mxu0 0
    %752 = vmatprep.subr.bf16.mxu0 0
    %753 = vmatpush1.bf16.msra.mxu0 0
    %754 = vmatprep.subr.bf16.mxu0 0
    %755 = vmatpush1.bf16.msra.mxu0 0
    %756 = vmatprep.subr.bf16.mxu0 0
    %757 = vmatpush1.bf16.msra.mxu0 0
    %758 = vmatprep.subr.bf16.mxu0 0
    %759 = vmatpush1.bf16.msra.mxu0 0
    %760 = vmatprep.subr.bf16.mxu0 0
    %761 = vmatpush1.bf16.msra.mxu0 0
    %762 = vmatprep.subr.bf16.mxu0 0
    %763 = vmatpush1.bf16.msra.mxu0 0
    %764 = vmatprep.subr.bf16.mxu0 0
    %765 = vmatpush1.bf16.msra.mxu0 0
    %766 = vmatprep.subr.bf16.mxu0 0
    %767 = vmatpush1.bf16.msra.mxu0 0
    %768 = vmatprep.subr.bf16.mxu0 0
    %769 = vmatpush1.bf16.msra.mxu0 0
    %770 = vmatprep.subr.bf16.mxu0 0
    %771 = vmatpush1.bf16.msra.mxu0 0
    %772 = vmatprep.mubr.bf16.mxu0 0
    %773 = vmatmul.mubr.bf16.gmra.mrb[0].mxu0 %v717
    %v774 = vpop.f32.mrb[0].mxu0
    %v775 = vadd.f32 0.0, %v774
    %v776 = vpop.f32.mrb[0].mxu0
    %v777 = vpop.f32.mrb[0].mxu0
    %v778 = vadd.f32 0.0, %v777
    %v779 = vpop.f32.mrb[0].mxu0
    %780 = vmatprep.mubr.bf16.mxu0 0
    %781 = vmatmul.mubr.bf16.gmra.mrb[0].mxu0 %v720
    %v782 = vpop.f32.mrb[0].mxu0
    %v783 = vadd.f32 0.0, %v782
    %v784 = vpop.f32.mrb[0].mxu0
    %v785 = vpop.f32.mrb[0].mxu0
    %v786 = vadd.f32 0.0, %v785
    %v787 = vpop.f32.mrb[0].mxu0
    %788 = vmatprep.mubr.bf16.mxu0 0
    %789 = vmatmul.mubr.bf16.gmra.mrb[0].mxu0 %v723
    %v790 = vpop.f32.mrb[0].mxu0
    %v791 = vadd.f32 0.0, %v790
    %v792 = vpop.f32.mrb[0].mxu0
    %v793 = vpop.f32.mrb[0].mxu0
    %v794 = vadd.f32 0.0, %v793
    %v795 = vpop.f32.mrb[0].mxu0
    %796 = vmatprep.mubr.bf16.mxu0 0
    %797 = vmatmul.mubr.bf16.gmra.mrb[0].mxu0 %v726
    %v798 = vpop.f32.mrb[0].mxu0
    %v799 = vadd.f32 0.0, %v798
    %v800 = vpop.f32.mrb[0].mxu0
    %v801 = vpop.f32.mrb[0].mxu0
    %v802 = vadd.f32 0.0, %v801
    %v803 = vpop.f32.mrb[0].mxu0
    %804 = vmatprep.mubr.bf16.mxu0 0
    %805 = vmatmul.mubr.bf16.gmra.mrb[0].mxu0 %v729
    %v806 = vpop.f32.mrb[0].mxu0
    %v807 = vadd.f32 0.0, %v806
    %v808 = vpop.f32.mrb[0].mxu0
    %v809 = vpop.f32.mrb[0].mxu0
    %v810 = vadd.f32 0.0, %v809
    %v811 = vpop.f32.mrb[0].mxu0
    %812 = vmatprep.mubr.bf16.mxu0 0
    %813 = vmatmul.mubr.bf16.gmra.mrb[0].mxu0 %v732
    %v814 = vpop.f32.mrb[0].mxu0
    %v815 = vadd.f32 0.0, %v814
    %v816 = vpop.f32.mrb[0].mxu0
    %v817 = vpop.f32.mrb[0].mxu0
    %v818 = vadd.f32 0.0, %v817
    %v819 = vpop.f32.mrb[0].mxu0
    %820 = vmatprep.mubr.bf16.mxu0 0
    %821 = vmatmul.mubr.bf16.gmra.mrb[0].mxu0 %v735
    %v822 = vpop.f32.mrb[0].mxu0
    %v823 = vadd.f32 0.0, %v822
    %v824 = vpop.f32.mrb[0].mxu0
    %v825 = vpop.f32.mrb[0].mxu0
    %v826 = vadd.f32 0.0, %v825
    %v827 = vpop.f32.mrb[0].mxu0
    %828 = vmatprep.mubr.bf16.mxu0 0
    %829 = vmatmul.mubr.bf16.gmra.mrb[0].mxu0 %v738
    %v830 = vpop.f32.mrb[0].mxu0
    %v831 = vadd.f32 0.0, %v830
    %v832 = vpop.f32.mrb[0].mxu0
    %v833 = vpop.f32.mrb[0].mxu0
    %v834 = vadd.f32 0.0, %v833
    %v835 = vpop.f32.mrb[0].mxu0
    %836 = vdwg.mxu0
    %v837 = vadd.f32 %v628, %v775
    %v838 = vadd.f32 %v629, %v778
    %v839 = vadd.f32 %v630, %v783
    %v840 = vadd.f32 %v631, %v786
    %v841 = vadd.f32 %v632, %v791
    %v842 = vadd.f32 %v633, %v794
    %v843 = vadd.f32 %v634, %v799
    %v844 = vadd.f32 %v635, %v802
    %v845 = vadd.f32 %v636, %v807
    %v846 = vadd.f32 %v637, %v810
    %v847 = vadd.f32 %v638, %v815
    %v848 = vadd.f32 %v639, %v818
    %v849 = vadd.f32 %v640, %v823
    %v850 = vadd.f32 %v641, %v826
    %v851 = vadd.f32 %v642, %v831
    %v852 = vadd.f32 %v643, %v834
    %853 = vxpose.xlu0.b32.start [1/16] %v837, 128
    %854 = vxpose.xlu0.b32.cont [2/16] %v838, 128
    %855 = vxpose.xlu0.b32.cont [3/16] %v839, 128
    %856 = vxpose.xlu0.b32.cont [4/16] %v840, 128
    %857 = vxpose.xlu0.b32.cont [5/16] %v841, 128
    %858 = vxpose.xlu0.b32.cont [6/16] %v842, 128
    %859 = vxpose.xlu0.b32.cont [7/16] %v843, 128
    %860 = vxpose.xlu0.b32.cont [8/16] %v844, 128
    %861 = vxpose.xlu0.b32.cont [9/16] %v845, 128
    %862 = vxpose.xlu0.b32.cont [10/16] %v846, 128
    %863 = vxpose.xlu0.b32.cont [11/16] %v847, 128
    %864 = vxpose.xlu0.b32.cont [12/16] %v848, 128
    %865 = vxpose.xlu0.b32.cont [13/16] %v849, 128
    %866 = vxpose.xlu0.b32.cont [14/16] %v850, 128
    %867 = vxpose.xlu0.b32.cont [15/16] %v851, 128
    %868 = vxpose.xlu0.b32.end [16/16] %v852, 128
    %v869 = vpop.trf.xlu0
    %v870 = vpop.trf.xlu0
    %v871 = vpop.trf.xlu0
    %v872 = vpop.trf.xlu0
    %v873 = vpop.trf.xlu0
    %v874 = vpop.trf.xlu0
    %v875 = vpop.trf.xlu0
    %v876 = vpop.trf.xlu0
    %v877 = vpop.trf.xlu0
    %v878 = vpop.trf.xlu0
    %v879 = vpop.trf.xlu0
    %v880 = vpop.trf.xlu0
    %v881 = vpop.trf.xlu0
    %v882 = vpop.trf.xlu0
    %v883 = vpop.trf.xlu0
    %v884 = vpop.trf.xlu0
    %v885 = vmax.f32 %v869, 0.0
    %v886 = vmax.f32 %v870, 0.0
    %v887 = vmax.f32 %v871, 0.0
    %v888 = vmax.f32 %v872, 0.0
    %889 = vst [vmem:[#allocation2] sm:$0xff] %v885
    %890 = vst [vmem:[#allocation2 + $0x8] sm:$0xff] %v886
    %891 = vst [vmem:[#allocation2 + $0x10] sm:$0xff] %v887
    %892 = vst [vmem:[#allocation2 + $0x18] sm:$0xff] %v888
    // Predicated region
    $region34: #{tpu_custom_call.1} parent=1 // pred_check
      _
    $region35: #{tpu_custom_call.1} parent=1 // pred_check_branch
      %894 = sbr.rel (0) target = $region37
    $region36: #{tpu_custom_call.1} parent=1 // pred_region
      %s896 = ssub.s32 512, 512
      %897 = vsyncadd [#allocation3], %s896
      %s898 = sshll.u32 [#allocation2], 4
      %s899 = int_to_ptr.vmem [resolvable:$true] %s898
      %904 = dma.vmem_to_hbm [thread:$0]  %s899, 512, %s8, [#allocation3], 128, 128, 8
    $region37: #{tpu_custom_call.1} parent=1 // pred_fallthru
      _
    // Predicated region
    $region38: #{tpu_custom_call.1} parent=1 // pred_check
      _
    $region39: #{tpu_custom_call.1} parent=1 // pred_check_branch
      %906 = sbr.rel (0) target = $region41
    $region40: #{tpu_custom_call.1} parent=1 // pred_region
      %907 = dma.done [#allocation3], 512
    $region41: #{tpu_custom_call.1} parent=1 // pred_fallthru
      _
    %908 = vsyncpa [#allocation3], 1

</llo_original>
